<compile_context>
chip_gen: v7x
topology: tpu7x:2x2x1
jax: 0.10.0
libtpu: 0.0.40
codegen_flags: <defaults>
</compile_context>

<pallas_src>
import jax
import jax.numpy as jnp
from jax.experimental import pallas as pl
from jax.experimental.pallas import tpu as pltpu

LANE = 128


def _round_up(n, m):
    return ((n + m - 1) // m) * m


def value_net_kernel(x_ref,
                     w1_ref, b1_ref,
                     w2_ref, b2_ref,
                     w3_ref,
                     b3_ref, w4_ref, b4_ref,
                     o_ref):
    # x_ref: (input_dims, TILE_B) -- batch on lanes, features on sublanes.
    x = x_ref[...]
    in_dims = x.shape[0]

    # ---- layer 1: tanh(W1 @ x + b1).  K = 3, so do it as 3 broadcast FMAs on
    # the VPU instead of a degenerate-K MXU matmul.
    h1 = w1_ref[:, 0:1] * x[0:1, :]
    for k in range(1, in_dims):
        h1 = h1 + w1_ref[:, k:k + 1] * x[k:k + 1, :]
    h1 = jnp.tanh(h1 + b1_ref[...])                                   # (20, TILE_B)

    # ---- layer 2: tanh(W2 @ h1 + b2) on the MXU ((20,20) @ (20,TILE_B)).
    h2 = jnp.tanh(
        jnp.dot(w2_ref[...], h1, preferred_element_type=jnp.float32)
        + b2_ref[...])                                                # (20, TILE_B)

    # ---- layer 3 (fc3, out width 1): VPU multiply + sublane reduction,
    # not an N=1 MXU matmul.
    h3 = jnp.tanh(
        jnp.sum(h2 * w3_ref[...], axis=0, keepdims=True) + b3_ref[0, 0])  # (1, TILE_B)

    # ---- layer 4 (fc4, 1x1 linear): pure scalar FMA on the VPU.
    o_ref[...] = (h3 * w4_ref[0, 0] + b4_ref[0, 0]).astype(o_ref.dtype)


def value_net_forward(x, params, *, tile_b=4096, interpret=False):
    """x: (B, input_dims) float32 -> (B, 1) float32."""
    B, in_dims = x.shape
    w1, b1 = params["w1"], params["b1"]          # (20, 3),  (20, 1)
    w2, b2 = params["w2"], params["b2"]          # (20, 20), (20, 1)
    w3c, b3 = params["w3_col"], params["b3"]     # (20, 1),  (1, 1)
    w4, b4 = params["w4"], params["b4"]          # (1, 1),   (1, 1)
    assert w4.shape == (1, 1) and b4.shape == (1, 1) and b3.shape == (1, 1)

    # Lane-aligned batch tile; pad batch up to a whole number of tiles.
    b_lane = _round_up(max(B, 1), LANE)
    tb = _round_up(min(tile_b, b_lane), LANE)
    n_tiles = pl.cdiv(b_lane, tb)
    b_pad = n_tiles * tb

    x_t = jnp.pad(x.T.astype(jnp.float32), ((0, 0), (0, b_pad - B)))  # (in_dims, b_pad)

    def resident(shape):
        # whole-array VMEM block, constant index map -> stays resident across the grid
        return pl.BlockSpec(shape, lambda i: tuple(0 for _ in shape))

    smem_scalar = pl.BlockSpec(memory_space=pltpu.MemorySpace.SMEM)

    out = pl.pallas_call(
        value_net_kernel,
        out_shape=jax.ShapeDtypeStruct((1, b_pad), jnp.float32),
        grid=(n_tiles,),
        in_specs=[
            pl.BlockSpec((in_dims, tb), lambda i: (0, i)),   # x^T batch tile
            resident(w1.shape), resident(b1.shape),
            resident(w2.shape), resident(b2.shape),
            resident(w3c.shape),
            smem_scalar, smem_scalar, smem_scalar,           # b3, w4, b4 scalars
        ],
        out_specs=pl.BlockSpec((1, tb), lambda i: (0, i)),   # lane-dense output tile
        compiler_params=pltpu.CompilerParams(
            dimension_semantics=("parallel",)),
        interpret=interpret,
    )(x_t, w1, b1, w2, b2, w3c, b3, w4, b4)

    return out[:, :B].T                                       # (B, 1)


def xavier_normal(key, shape):
    # torch.nn.init.xavier_normal_ on a (fan_out, fan_in) weight.
    fan_out, fan_in = shape
    std = (2.0 / (fan_in + fan_out)) ** 0.5
    return std * jax.random.normal(key, shape, dtype=jnp.float32)


def make_params(key, input_dims=3, fc1_dims=20, fc2_dims=20, fc3_dims=1, out_dims=1):
    k1, k2, k3, k4 = jax.random.split(key, 4)
    w3 = xavier_normal(k3, (fc3_dims, fc2_dims))          # torch fc3.weight (1, 20)
    return {
        "w1": xavier_normal(k1, (fc1_dims, input_dims)),  # torch fc1.weight (20, 3)
        "b1": jnp.zeros((fc1_dims, 1), jnp.float32),
        "w2": xavier_normal(k2, (fc2_dims, fc1_dims)),    # torch fc2.weight (20, 20)
        "b2": jnp.zeros((fc2_dims, 1), jnp.float32),
        "w3_col": w3.T,                                   # (20, 1) column
        "b3": jnp.zeros((1, 1), jnp.float32),
        "w4": xavier_normal(k4, (out_dims, fc3_dims)),    # (1, 1)
        "b4": jnp.zeros((1, 1), jnp.float32),
    }


def value_net_ref(x, p):
    # pure-JAX reference (high precision so the comparison is meaningful)
    hp = jax.lax.Precision.HIGHEST
    h = jnp.tanh(jnp.dot(x, p["w1"].T, precision=hp) + p["b1"].T)
    h = jnp.tanh(jnp.dot(h, p["w2"].T, precision=hp) + p["b2"].T)
    h = jnp.tanh(jnp.dot(h, p["w3_col"], precision=hp) + p["b3"].T)
    return h * p["w4"][0, 0] + p["b4"][0, 0]


# TODO(synk): jacobian / hessian / batch_* methods of the torch module use
# torch.autograd.functional and are not part of the forward pass; not ported.

if __name__ == "__main__":
    key = jax.random.PRNGKey(0)
    kx, kp = jax.random.split(key)

    # small single-tile check
    B, input_dims = 8, 3
    x = jax.random.normal(kx, (B, input_dims), dtype=jnp.float32)
    params = make_params(kp, input_dims=input_dims)

    out = value_net_forward(x, params)
    out = jax.block_until_ready(out)
    ref = value_net_ref(x, params)
    assert out.shape == (B, 1)
    assert jnp.allclose(out, ref, atol=1e-5, rtol=1e-4), (out, ref)

    # multi-tile + batch-remainder check (3 grid steps, padded 300 -> 384)
    B2 = 300
    x2 = jax.random.normal(jax.random.PRNGKey(7), (B2, input_dims), dtype=jnp.float32)
    out2 = jax.block_until_ready(value_net_forward(x2, params, tile_b=128))
    ref2 = value_net_ref(x2, params)
    assert out2.shape == (B2, 1)
    assert jnp.allclose(out2, ref2, atol=1e-5, rtol=1e-4), (out2, ref2)

    print("KERNEL_OK")
</pallas_src>

<mosaic_0001>
module attributes {stable_mosaic.version = 11 : i64} {
  func.func @value_net_kernel(%arg0: i32, %arg1: memref<3x128xf32, #tpu.memory_space<vmem>>, %arg2: memref<20x3xf32, #tpu.memory_space<vmem>>, %arg3: memref<20x1xf32, #tpu.memory_space<vmem>>, %arg4: memref<20x20xf32, #tpu.memory_space<vmem>>, %arg5: memref<20x1xf32, #tpu.memory_space<vmem>>, %arg6: memref<20x1xf32, #tpu.memory_space<vmem>>, %arg7: memref<1x1xf32, #tpu.memory_space<smem>>, %arg8: memref<1x1xf32, #tpu.memory_space<smem>>, %arg9: memref<1x1xf32, #tpu.memory_space<smem>>, %arg10: memref<1x128xf32, #tpu.memory_space<vmem>>) attributes {dimension_semantics = [#tpu.dimension_semantics<parallel>], iteration_bounds = array<i64: 1>, scalar_prefetch = 0 : i64, scratch_operands = 0 : i64, tpu.core_type = #tpu.core_type<tc>, window_params = [{transform_indices = @transform_0, window_bounds = array<i64: 3, 128>}, {pipeline_mode = #tpu.pipeline_mode<synchronous>, transform_indices = @transform_1, window_bounds = array<i64: 20, 3>}, {pipeline_mode = #tpu.pipeline_mode<synchronous>, transform_indices = @transform_2, window_bounds = array<i64: 20, 1>}, {pipeline_mode = #tpu.pipeline_mode<synchronous>, transform_indices = @transform_3, window_bounds = array<i64: 20, 20>}, {pipeline_mode = #tpu.pipeline_mode<synchronous>, transform_indices = @transform_4, window_bounds = array<i64: 20, 1>}, {pipeline_mode = #tpu.pipeline_mode<synchronous>, transform_indices = @transform_5, window_bounds = array<i64: 20, 1>}, {transform_indices = @transform_6, window_bounds = array<i64: 1, 1>}, {transform_indices = @transform_7, window_bounds = array<i64: 1, 1>}, {transform_indices = @transform_8, window_bounds = array<i64: 1, 1>}, {transform_indices = @transform_9, window_bounds = array<i64: 1, 128>}]} {
    %c0 = arith.constant 0 : index
    %c0_0 = arith.constant 0 : index
    %0 = vector.load %arg1[%c0, %c0_0] : memref<3x128xf32, #tpu.memory_space<vmem>>, vector<3x128xf32>
    %c0_1 = arith.constant 0 : index
    %c0_2 = arith.constant 0 : index
    %1 = vector.load %arg2[%c0_1, %c0_2] : memref<20x3xf32, #tpu.memory_space<vmem>>, vector<20x1xf32>
    %2 = vector.extract_strided_slice %0 {offsets = [0, 0], sizes = [1, 128], strides = [1, 1]} : vector<3x128xf32> to vector<1x128xf32>
    %3 = vector.broadcast %1 : vector<20x1xf32> to vector<20x128xf32>
    %4 = vector.broadcast %2 : vector<1x128xf32> to vector<20x128xf32>
    %5 = arith.mulf %3, %4 : vector<20x128xf32>
    %c0_3 = arith.constant 0 : index
    %c1 = arith.constant 1 : index
    %6 = vector.load %arg2[%c0_3, %c1] : memref<20x3xf32, #tpu.memory_space<vmem>>, vector<20x1xf32>
    %7 = vector.extract_strided_slice %0 {offsets = [1, 0], sizes = [1, 128], strides = [1, 1]} : vector<3x128xf32> to vector<1x128xf32>
    %8 = vector.broadcast %6 : vector<20x1xf32> to vector<20x128xf32>
    %9 = vector.broadcast %7 : vector<1x128xf32> to vector<20x128xf32>
    %10 = arith.mulf %8, %9 : vector<20x128xf32>
    %11 = arith.addf %5, %10 : vector<20x128xf32>
    %c0_4 = arith.constant 0 : index
    %c2 = arith.constant 2 : index
    %12 = vector.load %arg2[%c0_4, %c2] : memref<20x3xf32, #tpu.memory_space<vmem>>, vector<20x1xf32>
    %13 = vector.extract_strided_slice %0 {offsets = [2, 0], sizes = [1, 128], strides = [1, 1]} : vector<3x128xf32> to vector<1x128xf32>
    %14 = vector.broadcast %12 : vector<20x1xf32> to vector<20x128xf32>
    %15 = vector.broadcast %13 : vector<1x128xf32> to vector<20x128xf32>
    %16 = arith.mulf %14, %15 : vector<20x128xf32>
    %17 = arith.addf %11, %16 : vector<20x128xf32>
    %c0_5 = arith.constant 0 : index
    %c0_6 = arith.constant 0 : index
    %18 = vector.load %arg3[%c0_5, %c0_6] : memref<20x1xf32, #tpu.memory_space<vmem>>, vector<20x1xf32>
    %19 = vector.broadcast %18 : vector<20x1xf32> to vector<20x128xf32>
    %20 = arith.addf %17, %19 : vector<20x128xf32>
    %21 = math.tanh %20 : vector<20x128xf32>
    %c0_7 = arith.constant 0 : index
    %c0_8 = arith.constant 0 : index
    %22 = vector.load %arg4[%c0_7, %c0_8] : memref<20x20xf32, #tpu.memory_space<vmem>>, vector<20x20xf32>
    %cst = arith.constant dense<0.000000e+00> : vector<20x128xf32>
    %23 = tpu.matmul %22, %21, %cst {dimension_numbers = #tpu.dot_dimension_numbers<[1], [0], [0], [1], [0, 0, 1, 1], [], []>} : vector<20x20xf32>, vector<20x128xf32>, vector<20x128xf32> -> vector<20x128xf32>
    %c0_9 = arith.constant 0 : index
    %c0_10 = arith.constant 0 : index
    %24 = vector.load %arg5[%c0_9, %c0_10] : memref<20x1xf32, #tpu.memory_space<vmem>>, vector<20x1xf32>
    %25 = vector.broadcast %24 : vector<20x1xf32> to vector<20x128xf32>
    %26 = arith.addf %23, %25 : vector<20x128xf32>
    %27 = math.tanh %26 : vector<20x128xf32>
    %c0_11 = arith.constant 0 : index
    %c0_12 = arith.constant 0 : index
    %28 = vector.load %arg6[%c0_11, %c0_12] : memref<20x1xf32, #tpu.memory_space<vmem>>, vector<20x1xf32>
    %29 = vector.broadcast %28 : vector<20x1xf32> to vector<20x128xf32>
    %30 = arith.mulf %27, %29 : vector<20x128xf32>
    %cst_13 = arith.constant dense<0.000000e+00> : vector<128xf32>
    %31 = vector.multi_reduction <add>, %30, %cst_13 [0] : vector<20x128xf32> to vector<128xf32>
    %32 = vector.shape_cast %31 : vector<128xf32> to vector<1x128xf32>
    %c0_14 = arith.constant 0 : index
    %c0_15 = arith.constant 0 : index
    %33 = memref.load %arg7[%c0_14, %c0_15] : memref<1x1xf32, #tpu.memory_space<smem>>
    %34 = vector.broadcast %33 : f32 to vector<1x128xf32>
    %35 = arith.addf %32, %34 : vector<1x128xf32>
    %36 = math.tanh %35 : vector<1x128xf32>
    %c0_16 = arith.constant 0 : index
    %c0_17 = arith.constant 0 : index
    %37 = memref.load %arg8[%c0_16, %c0_17] : memref<1x1xf32, #tpu.memory_space<smem>>
    %38 = vector.broadcast %37 : f32 to vector<1x128xf32>
    %39 = arith.mulf %36, %38 : vector<1x128xf32>
    %c0_18 = arith.constant 0 : index
    %c0_19 = arith.constant 0 : index
    %40 = memref.load %arg9[%c0_18, %c0_19] : memref<1x1xf32, #tpu.memory_space<smem>>
    %41 = vector.broadcast %40 : f32 to vector<1x128xf32>
    %42 = arith.addf %39, %41 : vector<1x128xf32>
    %c0_20 = arith.constant 0 : index
    %c0_21 = arith.constant 0 : index
    %43 = vector.load %arg10[%c0_20, %c0_21] : memref<1x128xf32, #tpu.memory_space<vmem>>, vector<1x128xf32>
    tpu.vector_store %arg10[%c0_20, %c0_21], %42 {strides = array<i32>} : memref<1x128xf32, #tpu.memory_space<vmem>>, vector<1x128xf32>,
    return
  }
  func.func @transform_0(%arg0: i32) -> (i32, i32) {
    %c0_i32 = arith.constant 0 : i32
    %c0_i32_0 = arith.constant 0 : i32
    return %c0_i32, %arg0 : i32, i32
  }
  func.func @transform_1(%arg0: i32) -> (i32, i32) {
    %c0_i32 = arith.constant 0 : i32
    %c0_i32_0 = arith.constant 0 : i32
    %c0_i32_1 = arith.constant 0 : i32
    return %c0_i32, %c0_i32_0 : i32, i32
  }
  func.func @transform_2(%arg0: i32) -> (i32, i32) {
    %c0_i32 = arith.constant 0 : i32
    %c0_i32_0 = arith.constant 0 : i32
    %c0_i32_1 = arith.constant 0 : i32
    return %c0_i32, %c0_i32_0 : i32, i32
  }
  func.func @transform_3(%arg0: i32) -> (i32, i32) {
    %c0_i32 = arith.constant 0 : i32
    %c0_i32_0 = arith.constant 0 : i32
    %c0_i32_1 = arith.constant 0 : i32
    return %c0_i32, %c0_i32_0 : i32, i32
  }
  func.func @transform_4(%arg0: i32) -> (i32, i32) {
    %c0_i32 = arith.constant 0 : i32
    %c0_i32_0 = arith.constant 0 : i32
    %c0_i32_1 = arith.constant 0 : i32
    return %c0_i32, %c0_i32_0 : i32, i32
  }
  func.func @transform_5(%arg0: i32) -> (i32, i32) {
    %c0_i32 = arith.constant 0 : i32
    %c0_i32_0 = arith.constant 0 : i32
    %c0_i32_1 = arith.constant 0 : i32
    return %c0_i32, %c0_i32_0 : i32, i32
  }
  func.func @transform_6(%arg0: i32) -> (i32, i32) {
    %c0_i32 = arith.constant 0 : i32
    %c0_i32_0 = arith.constant 0 : i32
    %c0_i32_1 = arith.constant 0 : i32
    return %c0_i32, %c0_i32_0 : i32, i32
  }
  func.func @transform_7(%arg0: i32) -> (i32, i32) {
    %c0_i32 = arith.constant 0 : i32
    %c0_i32_0 = arith.constant 0 : i32
    %c0_i32_1 = arith.constant 0 : i32
    return %c0_i32, %c0_i32_0 : i32, i32
  }
  func.func @transform_8(%arg0: i32) -> (i32, i32) {
    %c0_i32 = arith.constant 0 : i32
    %c0_i32_0 = arith.constant 0 : i32
    %c0_i32_1 = arith.constant 0 : i32
    return %c0_i32, %c0_i32_0 : i32, i32
  }
  func.func @transform_9(%arg0: i32) -> (i32, i32) {
    %c0_i32 = arith.constant 0 : i32
    %c0_i32_0 = arith.constant 0 : i32
    return %c0_i32, %arg0 : i32, i32
  }
}

</mosaic_0001>

<llo_original>
// kernel: tpu_custom_call.1
$region0: #{tpu_custom_call.1}
  #allocation0 [shape = 'u32[]', space=smem, size = 0x4, offset = 0x4, fixed_abs, tag = 'smem constant byte address 0x4 - core index']
  #allocation1 [shape = 'u32[144,128]{1,0:T(1,128)}', space=vmem, size = 0x12000, scoped, tag = 'internal scratch']
  #allocation2 [shape = 'f32[1,1]{1,0:T(1,128)S(6)}', space=smem, size = 0x200, scoped, tag = 'scoped memory for tpu_custom_call.1']
  #allocation3 [shape = 'f32[1,1]{1,0:T(1,128)S(6)}', space=smem, size = 0x200, scoped, tag = 'scoped memory for tpu_custom_call.1']
  #allocation4 [shape = 'f32[1,1]{1,0:T(1,128)S(6)}', space=smem, size = 0x200, scoped, tag = 'scoped memory for tpu_custom_call.1']
  %s0 = inlined_call_operand.vmem [shape: f32[3,128], index: 0, kind: input, shape index: {}]
  %s1 = inlined_call_operand.vmem [shape: f32[20,3], index: 1, kind: input, shape index: {}]
  %s2 = inlined_call_operand.vmem [shape: f32[20,1], index: 2, kind: input, shape index: {}]
  %s3 = inlined_call_operand.vmem [shape: f32[20,20], index: 3, kind: input, shape index: {}]
  %s4 = inlined_call_operand.vmem [shape: f32[20,1], index: 4, kind: input, shape index: {}]
  %s5 = inlined_call_operand.vmem [shape: f32[20,1], index: 5, kind: input, shape index: {}]
  %s6 = inlined_call_operand.<no memory space> [shape: f32[1,1], index: 6, kind: input, shape index: {}]
  %s7 = inlined_call_operand.<no memory space> [shape: f32[1,1], index: 7, kind: input, shape index: {}]
  %s8 = inlined_call_operand.<no memory space> [shape: f32[1,1], index: 8, kind: input, shape index: {}]
  %s9 = inlined_call_operand.hbm [shape: f32[1,128], index: 9, kind: output, shape index: {}]
  %s10 = sld [smem:[#allocation0]]
  $region46: #{tpu_custom_call.1} parent=0
    _
  %s12 = ssub.s32 1, %s10
  %s13 = scalar_select 0, %s12, %s10
  %14 = sst [smem:[#allocation2]] %s6
  %15 = sst [smem:[#allocation3]] %s7
  %16 = sst [smem:[#allocation4]] %s8
  $region1: #{tpu_custom_call.1} parent=0
    #allocation5 [shape = 'u8[512]{0}', space=vmem, size = 0x400, scoped, tag = 'output window, operand 0, single buffered']
    #allocation6 [shape = 's32[1]{0}', space=sflag, size = 0x4, scoped, tag = 'scoped memory for tpu_custom_call.1']
    %17 = vsyncpa [#allocation6], 0
    // Predicated region
    $region2: #{tpu_custom_call.1} parent=1 // pred_check
      _
    $region3: #{tpu_custom_call.1} parent=1 // pred_check_branch
      %19 = sbr.rel (0) target = $region5
    $region4: #{tpu_custom_call.1} parent=1 // pred_region
      _
    $region5: #{tpu_custom_call.1} parent=1 // pred_fallthru
      _
    // Predicated region
    $region6: #{tpu_custom_call.1} parent=1 // pred_check
      _
    $region7: #{tpu_custom_call.1} parent=1 // pred_check_branch
      %21 = sbr.rel (0) target = $region9
    $region8: #{tpu_custom_call.1} parent=1 // pred_region
      _
    $region9: #{tpu_custom_call.1} parent=1 // pred_fallthru
      _
    // Predicated region
    $region10: #{tpu_custom_call.1} parent=1 // pred_check
      _
    $region11: #{tpu_custom_call.1} parent=1 // pred_check_branch
      %23 = sbr.rel (0) target = $region13
    $region12: #{tpu_custom_call.1} parent=1 // pred_region
      _
    $region13: #{tpu_custom_call.1} parent=1 // pred_fallthru
      _
    // Predicated region
    $region14: #{tpu_custom_call.1} parent=1 // pred_check
      _
    $region15: #{tpu_custom_call.1} parent=1 // pred_check_branch
      %25 = sbr.rel (0) target = $region17
    $region16: #{tpu_custom_call.1} parent=1 // pred_region
      _
    $region17: #{tpu_custom_call.1} parent=1 // pred_fallthru
      _
    // Predicated region
    $region18: #{tpu_custom_call.1} parent=1 // pred_check
      _
    $region19: #{tpu_custom_call.1} parent=1 // pred_check_branch
      %27 = sbr.rel (0) target = $region21
    $region20: #{tpu_custom_call.1} parent=1 // pred_region
      _
    $region21: #{tpu_custom_call.1} parent=1 // pred_fallthru
      _
    // Predicated region
    $region22: #{tpu_custom_call.1} parent=1 // pred_check
      _
    $region23: #{tpu_custom_call.1} parent=1 // pred_check_branch
      %29 = sbr.rel (0) target = $region25
    $region24: #{tpu_custom_call.1} parent=1 // pred_region
      _
    $region25: #{tpu_custom_call.1} parent=1 // pred_fallthru
      _
    // Predicated region
    $region26: #{tpu_custom_call.1} parent=1 // pred_check
      _
    $region27: #{tpu_custom_call.1} parent=1 // pred_check_branch
      %31 = sbr.rel (0) target = $region29
    $region28: #{tpu_custom_call.1} parent=1 // pred_region
      _
    $region29: #{tpu_custom_call.1} parent=1 // pred_fallthru
      _
    // Predicated region
    $region30: #{tpu_custom_call.1} parent=1 // pred_check
      _
    $region31: #{tpu_custom_call.1} parent=1 // pred_check_branch
      %33 = sbr.rel (0) target = $region33
    $region32: #{tpu_custom_call.1} parent=1 // pred_region
      _
    $region33: #{tpu_custom_call.1} parent=1 // pred_fallthru
      _
    // Predicated region
    $region34: #{tpu_custom_call.1} parent=1 // pred_check
      _
    $region35: #{tpu_custom_call.1} parent=1 // pred_check_branch
      %35 = sbr.rel (0) target = $region37
    $region36: #{tpu_custom_call.1} parent=1 // pred_region
      _
    $region37: #{tpu_custom_call.1} parent=1 // pred_fallthru
      _
    %v36 = vld [vmem:[%s0] sm:$0x7]
    %v37 = vld [vmem:[%s1] sm:$0xff]
    %v38 = vld [vmem:[%s1 + $0x8] sm:$0xff]
    %v39 = vld [vmem:[%s1 + $0x10] sm:$0xf]
    %41 = vset.pattern.permute.xlu0 0
    %42 = vperm.xlu0 %41, %v37
    %v43 = vpop.permute.xlu0 %42
    %46 = vset.pattern.permute.xlu0 0
    %47 = vperm.xlu0 %46, %v38
    %v48 = vpop.permute.xlu0 %47
    %51 = vset.pattern.permute.xlu0 0
    %52 = vperm.xlu0 %51, %v39
    %v53 = vpop.permute.xlu0 %52
    %v55 = vlaneseq
    %v56 = vshrl.u32 %v55, 7
    %v57 = vsub.s32 0, %v56
    %v58 = vrot.slane %v36, %v57
    %v59 = vmul.f32 %v43, %v58
    %v60 = vmul.f32 %v48, %v58
    %v61 = vmul.f32 %v53, %v58
    %62 = vset.pattern.permute.xlu0 1
    %63 = vperm.xlu0 %62, %v37
    %v64 = vpop.permute.xlu0 %63
    %66 = vset.pattern.permute.xlu0 1
    %67 = vperm.xlu0 %66, %v38
    %v68 = vpop.permute.xlu0 %67
    %70 = vset.pattern.permute.xlu0 1
    %71 = vperm.xlu0 %70, %v39
    %v72 = vpop.permute.xlu0 %71
    %v74 = vlaneseq
    %v75 = vshrl.u32 %v74, 7
    %v76 = vsub.s32 1, %v75
    %v77 = vrot.slane %v36, %v76
    %v78 = vmul.f32 %v64, %v77
    %v79 = vmul.f32 %v68, %v77
    %v80 = vmul.f32 %v72, %v77
    %v81 = vadd.f32 %v59, %v78
    %v82 = vadd.f32 %v60, %v79
    %v83 = vadd.f32 %v61, %v80
    %84 = vset.pattern.permute.xlu0 2
    %85 = vperm.xlu0 %84, %v37
    %v86 = vpop.permute.xlu0 %85
    %88 = vset.pattern.permute.xlu0 2
    %89 = vperm.xlu0 %88, %v38
    %v90 = vpop.permute.xlu0 %89
    %92 = vset.pattern.permute.xlu0 2
    %93 = vperm.xlu0 %92, %v39
    %v94 = vpop.permute.xlu0 %93
    %v96 = vlaneseq
    %v97 = vshrl.u32 %v96, 7
    %v98 = vsub.s32 2, %v97
    %v99 = vrot.slane %v36, %v98
    %v100 = vmul.f32 %v86, %v99
    %v101 = vmul.f32 %v90, %v99
    %v102 = vmul.f32 %v94, %v99
    %v103 = vadd.f32 %v81, %v100
    %v104 = vadd.f32 %v82, %v101
    %v105 = vadd.f32 %v83, %v102
    %v106 = vld [vmem:[%s2] sm:$0xff]
    %v107 = vld [vmem:[%s2 + $0x8] sm:$0xff]
    %v108 = vld [vmem:[%s2 + $0x10] sm:$0xf]
    %110 = vset.pattern.permute.xlu0 0
    %111 = vperm.xlu0 %110, %v106
    %v112 = vpop.permute.xlu0 %111
    %115 = vset.pattern.permute.xlu0 0
    %116 = vperm.xlu0 %115, %v107
    %v117 = vpop.permute.xlu0 %116
    %120 = vset.pattern.permute.xlu0 0
    %121 = vperm.xlu0 %120, %v108
    %v122 = vpop.permute.xlu0 %121
    %v124 = vadd.f32 %v103, %v112
    %v125 = vadd.f32 %v104, %v117
    %v126 = vadd.f32 %v105, %v122
    %v127 = vtanh.pop %v124
    %v128 = vtanh.pop %v125
    %v129 = vtanh.pop %v126
    %v130 = vld [vmem:[%s3] sm:$0xff]
    %v131 = vld [vmem:[%s3 + $0x8] sm:$0xff]
    %v132 = vld [vmem:[%s3 + $0x10] sm:$0xf]
    %v133 = vld [vmem:[%s4] sm:$0xff]
    %v134 = vld [vmem:[%s4 + $0x8] sm:$0xff]
    %v135 = vld [vmem:[%s4 + $0x10] sm:$0xf]
    %137 = vset.pattern.permute.xlu0 0
    %138 = vperm.xlu0 %137, %v133
    %v139 = vpop.permute.xlu0 %138
    %142 = vset.pattern.permute.xlu0 0
    %143 = vperm.xlu0 %142, %v134
    %v144 = vpop.permute.xlu0 %143
    %147 = vset.pattern.permute.xlu0 0
    %148 = vperm.xlu0 %147, %v135
    %v149 = vpop.permute.xlu0 %148
    %vm151 = vcmask 162816
    %v153 = vsel %vm151, %v130, 0
    %v156 = vsel %vm151, %v131, 0
    %v159 = vsel %vm151, %v132, 0
    %vm161 = vcmask 1043456
    %v163 = vsel %vm161, %v129, 0
    %165 = vmatprep.subr.mxu0 0.0
    %166 = vmatpush1.msra.mxu0 %v127
    %167 = vmatprep.subr.mxu0 0.0
    %168 = vmatpush1.msra.mxu0 %v128
    %169 = vmatprep.subr.mxu0 0.0
    %170 = vmatpush1.msra.mxu0 %v163
    %171 = vmatprep.subr.mxu0 0.0
    %172 = vmatpush1.msra.mxu0 0.0
    %173 = vmatprep.subr.mxu0 0.0
    %174 = vmatpush1.msra.mxu0 0.0
    %175 = vmatprep.subr.mxu0 0.0
    %176 = vmatpush1.msra.mxu0 0.0
    %177 = vmatprep.subr.mxu0 0.0
    %178 = vmatpush1.msra.mxu0 0.0
    %179 = vmatprep.subr.mxu0 0.0
    %180 = vmatpush1.msra.mxu0 0.0
    %181 = vmatprep.subr.mxu0 0.0
    %182 = vmatpush1.msra.mxu0 0.0
    %183 = vmatprep.subr.mxu0 0.0
    %184 = vmatpush1.msra.mxu0 0.0
    %185 = vmatprep.subr.mxu0 0.0
    %186 = vmatpush1.msra.mxu0 0.0
    %187 = vmatprep.subr.mxu0 0.0
    %188 = vmatpush1.msra.mxu0 0.0
    %189 = vmatprep.subr.mxu0 0.0
    %190 = vmatpush1.msra.mxu0 0.0
    %191 = vmatprep.subr.mxu0 0.0
    %192 = vmatpush1.msra.mxu0 0.0
    %193 = vmatprep.subr.mxu0 0.0
    %194 = vmatpush1.msra.mxu0 0.0
    %195 = vmatprep.subr.mxu0 0.0
    %196 = vmatpush1.msra.mxu0 0.0
    %197 = vmatprep.subr.mxu0 0.0
    %198 = vmatpush1.msra.mxu0 0.0
    %199 = vmatprep.subr.mxu0 0.0
    %200 = vmatpush1.msra.mxu0 0.0
    %201 = vmatprep.subr.mxu0 0.0
    %202 = vmatpush1.msra.mxu0 0.0
    %203 = vmatprep.subr.mxu0 0.0
    %204 = vmatpush1.msra.mxu0 0.0
    %205 = vmatprep.subr.mxu0 0.0
    %206 = vmatpush1.msra.mxu0 0.0
    %207 = vmatprep.subr.mxu0 0.0
    %208 = vmatpush1.msra.mxu0 0.0
    %209 = vmatprep.subr.mxu0 0.0
    %210 = vmatpush1.msra.mxu0 0.0
    %211 = vmatprep.subr.mxu0 0.0
    %212 = vmatpush1.msra.mxu0 0.0
    %213 = vmatprep.subr.mxu0 0.0
    %214 = vmatpush1.msra.mxu0 0.0
    %215 = vmatprep.subr.mxu0 0.0
    %216 = vmatpush1.msra.mxu0 0.0
    %217 = vmatprep.subr.mxu0 0.0
    %218 = vmatpush1.msra.mxu0 0.0
    %219 = vmatprep.subr.mxu0 0.0
    %220 = vmatpush1.msra.mxu0 0.0
    %221 = vmatprep.subr.mxu0 0.0
    %222 = vmatpush1.msra.mxu0 0.0
    %223 = vmatprep.subr.mxu0 0.0
    %224 = vmatpush1.msra.mxu0 0.0
    %225 = vmatprep.subr.mxu0 0.0
    %226 = vmatpush1.msra.mxu0 0.0
    %227 = vmatprep.subr.mxu0 0.0
    %228 = vmatpush1.msra.mxu0 0.0
    %229 = vmatprep.mubr.f32.mxu0 0.0
    %230 = vmatmul.mubr.f32.gmra.mrb[0].mxu0 %v153
    %v231 = vpop.f32.mrb[0].mxu0
    %v232 = vadd.f32 %v139, %v231
    %v233 = vpop.f32.mrb[0].mxu0
    %234 = vmatprep.mubr.f32.mxu0 0.0
    %235 = vmatmul.mubr.f32.gmra.mrb[0].mxu0 %v156
    %v236 = vpop.f32.mrb[0].mxu0
    %v237 = vadd.f32 %v144, %v236
    %v238 = vpop.f32.mrb[0].mxu0
    %239 = vmatprep.mubr.f32.mxu0 0.0
    %240 = vmatmul.mubr.f32.gmra.mrb[0].mxu0 %v159
    %v241 = vpop.f32.mrb[0].mxu0
    %v242 = vadd.f32 %v149, %v241
    %v243 = vpop.f32.mrb[0].mxu0
    %244 = vdwg.mxu0
    %v245 = vtanh.pop %v232
    %v246 = vtanh.pop %v237
    %v247 = vtanh.pop %v242
    %v248 = vld [vmem:[%s5] sm:$0xff]
    %v249 = vld [vmem:[%s5 + $0x8] sm:$0xff]
    %v250 = vld [vmem:[%s5 + $0x10] sm:$0xf]
    %252 = vset.pattern.permute.xlu0 0
    %253 = vperm.xlu0 %252, %v248
    %v254 = vpop.permute.xlu0 %253
    %257 = vset.pattern.permute.xlu0 0
    %258 = vperm.xlu0 %257, %v249
    %v259 = vpop.permute.xlu0 %258
    %262 = vset.pattern.permute.xlu0 0
    %263 = vperm.xlu0 %262, %v250
    %v264 = vpop.permute.xlu0 %263
    %v266 = vmul.f32 %v245, %v254
    %v267 = vmul.f32 %v246, %v259
    %v268 = vmul.f32 %v247, %v264
    %v269 = vadd.f32 %v266, %v267
    %v270 = vsel %vm161, %v268, 0.0
    %v271 = vadd.f32 %v269, %v270
    %v272 = vrot.slane %v271, 4
    %v273 = vadd.f32 %v271, %v272
    %v274 = vrot.slane %v273, 2
    %v275 = vadd.f32 %v273, %v274
    %v276 = vrot.slane %v275, 1
    %v277 = vadd.f32 %v275, %v276
    %s278 = sld [smem:[#allocation2]]
    %v279 = vstv %s278
    %v280 = vadd.f32 %v277, %v279
    %v281 = vtanh.pop %v280
    %s282 = sld [smem:[#allocation3]]
    %v283 = vstv %s282
    %v284 = vmul.f32 %v281, %v283
    %s285 = sld [smem:[#allocation4]]
    %v286 = vstv %s285
    %v287 = vadd.f32 %v284, %v286
    %288 = vst [vmem:[#allocation5] sm:$0x1] %v287
    // Predicated region
    $region38: #{tpu_custom_call.1} parent=1 // pred_check
      _
    $region39: #{tpu_custom_call.1} parent=1 // pred_check_branch
      %290 = sbr.rel (0) target = $region41
    $region40: #{tpu_custom_call.1} parent=1 // pred_region
      %s292 = ssub.s32 16, 16
      %293 = vsyncadd [#allocation6], %s292
      %s295 = sshll.u32 [#allocation5], 4
      %s296 = int_to_ptr.vmem [resolvable:$true] %s295
      %298 = dma.vmem_to_hbm [thread:$0]  %s296, 16, %s9, [#allocation6]
    $region41: #{tpu_custom_call.1} parent=1 // pred_fallthru
      _
    // Predicated region
    $region42: #{tpu_custom_call.1} parent=1 // pred_check
      _
    $region43: #{tpu_custom_call.1} parent=1 // pred_check_branch
      %300 = sbr.rel (0) target = $region45
    $region44: #{tpu_custom_call.1} parent=1 // pred_region
      %301 = dma.done [#allocation6], 16
    $region45: #{tpu_custom_call.1} parent=1 // pred_fallthru
      _
    %302 = vsyncpa [#allocation6], 1

</llo_original>
